<compile_context>
chip_gen: v7x
topology: tpu7x:2x2x1
jax: 0.10.0
libtpu: 0.0.40
codegen_flags: <defaults>
</compile_context>

<pallas_src>
import jax
import jax.numpy as jnp
from jax.experimental import pallas as pl
from jax.experimental.pallas import tpu as pltpu


def _round_up(x, m):
    return ((x + m - 1) // m) * m


def qvalue_kernel(x_ref, a_ref, w1s_ref, w1a_ref, w2_ref, misc_ref, b3_ref, o_ref):
    cdt = w1s_ref.dtype                  # MXU input dtype (f32 or bf16)
    misc = misc_ref[...]                 # (8, Hp): row0=b1, row1=b2, row2=w3
    b1 = misc[0:1, :]
    b2 = misc[1:2, :]
    w3 = misc[2:3, :]

    # fc1 + ReLU  (concat folded into two matmuls: [x a] @ [[w1_s],[w1_a]])
    h1 = (jnp.dot(x_ref[...].astype(cdt), w1s_ref[...],
                  preferred_element_type=jnp.float32)
          + jnp.dot(a_ref[...].astype(cdt), w1a_ref[...],
                    preferred_element_type=jnp.float32)
          + b1)
    h1 = jnp.maximum(h1, 0.0)

    # fc2 + ReLU
    h2 = jnp.dot(h1.astype(cdt), w2_ref[...],
                 preferred_element_type=jnp.float32) + b2
    h2 = jnp.maximum(h2, 0.0)

    # fc_out (out_features = 1): VPU multiply + XLU lane reduce, written as a
    # lane-dense (1, TB) row.  b3 is an SMEM scalar.
    q = jnp.sum(h2 * w3, axis=-1) + b3_ref[0]            # (TB,)
    o_ref[...] = q.reshape(1, -1).astype(o_ref.dtype)     # (1, TB)


def qvalue_forward(x, a, packed, *, max_block_b=1024):
    """x: (B, state_dim), a: (B, action_dim) -> (B, 1)."""
    w1s, w1a, w2, misc, b3 = packed
    B, state_dim = x.shape
    action_dim = a.shape[1]
    Hp = w2.shape[0]

    # Batch tile.  Lane-dense (1, TB) output blocks need TB % 128 == 0 unless
    # there is a single tile; for B >= 256 we also force >= 2 tiles so v7x can
    # shard the "parallel" batch axis across both TensorCores.
    max_block_b = max(128, (max_block_b // 128) * 128)
    if B >= 256:
        TB = min(max_block_b, max(128, 128 * (B // 256)))
    else:
        TB = _round_up(B, 8)
    Bp = _round_up(B, TB)
    if Bp != B:
        x = jnp.pad(x, ((0, Bp - B), (0, 0)))
        a = jnp.pad(a, ((0, Bp - B), (0, 0)))
    num_tiles = Bp // TB

    def resident(shape):
        return pl.BlockSpec(shape, lambda i: (0, 0))

    itemsize = jnp.dtype(w2.dtype).itemsize
    est_vmem = (2 * TB * (state_dim + action_dim + 1) * 4            # x/a/out (dbl-buf)
                + 2 * (w1s.size + w1a.size + w2.size) * itemsize     # resident weights
                + 2 * misc.size * 4
                + 4 * TB * Hp * 4)                                    # h1/h2 temps + slack
    vmem_limit = int(min(64 * 1024 * 1024, max(24 * 1024 * 1024, est_vmem)))

    flops = 2 * Bp * Hp * (state_dim + action_dim + Hp + 1)
    bytes_accessed = int((x.size + a.size) * 4
                         + (w1s.size + w1a.size + w2.size) * itemsize
                         + misc.size * 4 + 4 + Bp * 4)

    out = pl.pallas_call(
        qvalue_kernel,
        out_shape=jax.ShapeDtypeStruct((1, Bp), jnp.float32),
        grid=(num_tiles,),
        in_specs=[
            pl.BlockSpec((TB, state_dim), lambda i: (i, 0)),          # x tile
            pl.BlockSpec((TB, action_dim), lambda i: (i, 0)),         # a tile
            resident((state_dim, Hp)),                                # w1_s
            resident((action_dim, Hp)),                               # w1_a
            resident((Hp, Hp)),                                       # w2
            resident((8, Hp)),                                        # b1/b2/w3 packed
            pl.BlockSpec(memory_space=pltpu.MemorySpace.SMEM),        # b3 scalar
        ],
        out_specs=pl.BlockSpec((1, TB), lambda i: (0, i)),            # lane-dense row
        compiler_params=pltpu.CompilerParams(
            dimension_semantics=("parallel",),
            vmem_limit_bytes=vmem_limit),
        cost_estimate=pl.CostEstimate(
            flops=int(flops), transcendentals=0,
            bytes_accessed=bytes_accessed),
    )(x, a, w1s, w1a, w2, misc, b3)

    return out[0, :B].reshape(B, 1)


def init_raw_params(key, state_dim, hidden_dim, action_dim):
    """torch.nn.Linear default init: U(+/- 1/sqrt(fan_in)); weights stored
    torch-style as (out_features, in_features)."""
    ks = jax.random.split(key, 6)
    in1 = state_dim + action_dim

    def u(k, shape, fan_in):
        bound = 1.0 / (fan_in ** 0.5)
        return jax.random.uniform(k, shape, jnp.float32, -bound, bound)

    return dict(
        w1=u(ks[0], (hidden_dim, in1), in1),
        b1=u(ks[1], (hidden_dim,), in1),
        w2=u(ks[2], (hidden_dim, hidden_dim), hidden_dim),
        b2=u(ks[3], (hidden_dim,), hidden_dim),
        w3=u(ks[4], (1, hidden_dim), hidden_dim),
        b3=u(ks[5], (1,), hidden_dim),
    )


def pack_params(raw, state_dim, action_dim, *, use_bf16=False):
    """Kernel layout: w1 transposed + split, hidden padded to a multiple of
    128 with exact zeros, biases + w3 packed into one (8, Hp) array."""
    H = raw["w2"].shape[0]
    Hp = _round_up(max(H, 128), 128)
    wdt = jnp.bfloat16 if use_bf16 else jnp.float32

    w1t = raw["w1"].T.astype(jnp.float32)                       # (S+A, H)
    w1p = jnp.zeros((state_dim + action_dim, Hp), jnp.float32).at[:, :H].set(w1t)
    w1s = w1p[:state_dim].astype(wdt)
    w1a = w1p[state_dim:state_dim + action_dim].astype(wdt)

    w2p = jnp.zeros((Hp, Hp), jnp.float32).at[:H, :H].set(
        raw["w2"].T.astype(jnp.float32)).astype(wdt)

    misc = (jnp.zeros((8, Hp), jnp.float32)
            .at[0, :H].set(raw["b1"])
            .at[1, :H].set(raw["b2"])
            .at[2, :H].set(raw["w3"][0]))
    b3 = raw["b3"].astype(jnp.float32).reshape((1,))
    return (w1s, w1a, w2p, misc, b3)


def qvalue_ref(x, a, raw):
    """Plain-JAX reference, identical math to the PyTorch module."""
    cat = jnp.concatenate([x, a], axis=1)
    h1 = jnp.maximum(cat @ raw["w1"].T + raw["b1"], 0.0)
    h2 = jnp.maximum(h1 @ raw["w2"].T + raw["b2"], 0.0)
    return h2 @ raw["w3"].T + raw["b3"]


if __name__ == "__main__":
    state_dim, hidden_dim, action_dim = 12, 32, 4
    batch = 8

    key = jax.random.PRNGKey(0)
    kx, ka, kp, kx2, ka2 = jax.random.split(key, 5)
    x = jax.random.normal(kx, (batch, state_dim), jnp.float32)
    a = jax.random.normal(ka, (batch, action_dim), jnp.float32)
    raw = init_raw_params(kp, state_dim, hidden_dim, action_dim)
    packed = pack_params(raw, state_dim, action_dim)

    # Single-tile path.
    out = jax.block_until_ready(qvalue_forward(x, a, packed))
    ref = qvalue_ref(x, a, raw)
    assert out.shape == (batch, 1), out.shape
    assert jnp.allclose(out, ref, atol=1e-4, rtol=1e-4), "mismatch vs reference (f32)"

    # Multi-tile + batch-padding path (exercises lane-dense out layout).
    B2 = 300
    x2 = jax.random.normal(kx2, (B2, state_dim), jnp.float32)
    a2 = jax.random.normal(ka2, (B2, action_dim), jnp.float32)
    out2 = jax.block_until_ready(qvalue_forward(x2, a2, packed))
    ref2 = qvalue_ref(x2, a2, raw)
    assert out2.shape == (B2, 1), out2.shape
    assert jnp.allclose(out2, ref2, atol=1e-4, rtol=1e-4), "mismatch vs reference (multi-tile)"

    # Optional bf16-MXU-input path (looser tolerance vs the f32 reference).
    packed_bf16 = pack_params(raw, state_dim, action_dim, use_bf16=True)
    out3 = jax.block_until_ready(qvalue_forward(x, a, packed_bf16))
    assert jnp.allclose(out3, ref, atol=5e-2, rtol=5e-2), "mismatch vs reference (bf16)"

    print("KERNEL_OK")
</pallas_src>

<mosaic_0001>
module attributes {stable_mosaic.version = 11 : i64} {
  func.func @qvalue_kernel(%arg0: i32, %arg1: memref<8x12xf32, #tpu.memory_space<vmem>>, %arg2: memref<8x4xf32, #tpu.memory_space<vmem>>, %arg3: memref<12x128xf32, #tpu.memory_space<vmem>>, %arg4: memref<4x128xf32, #tpu.memory_space<vmem>>, %arg5: memref<128x128xf32, #tpu.memory_space<vmem>>, %arg6: memref<8x128xf32, #tpu.memory_space<vmem>>, %arg7: memref<1xf32, #tpu.memory_space<smem>>, %arg8: memref<1x8xf32, #tpu.memory_space<vmem>>) attributes {dimension_semantics = [#tpu.dimension_semantics<parallel>], iteration_bounds = array<i64: 1>, scalar_prefetch = 0 : i64, scratch_operands = 0 : i64, tpu.core_type = #tpu.core_type<tc>, window_params = [{transform_indices = @transform_0, window_bounds = array<i64: 8, 12>}, {transform_indices = @transform_1, window_bounds = array<i64: 8, 4>}, {pipeline_mode = #tpu.pipeline_mode<synchronous>, transform_indices = @transform_2, window_bounds = array<i64: 12, 128>}, {pipeline_mode = #tpu.pipeline_mode<synchronous>, transform_indices = @transform_3, window_bounds = array<i64: 4, 128>}, {pipeline_mode = #tpu.pipeline_mode<synchronous>, transform_indices = @transform_4, window_bounds = array<i64: 128, 128>}, {pipeline_mode = #tpu.pipeline_mode<synchronous>, transform_indices = @transform_5, window_bounds = array<i64: 8, 128>}, {transform_indices = @transform_6, window_bounds = array<i64: 1>}, {transform_indices = @transform_7, window_bounds = array<i64: 1, 8>}]} {
    %c0 = arith.constant 0 : index
    %c0_0 = arith.constant 0 : index
    %0 = vector.load %arg6[%c0, %c0_0] : memref<8x128xf32, #tpu.memory_space<vmem>>, vector<8x128xf32>
    %1 = vector.extract_strided_slice %0 {offsets = [0, 0], sizes = [1, 128], strides = [1, 1]} : vector<8x128xf32> to vector<1x128xf32>
    %2 = vector.extract_strided_slice %0 {offsets = [1, 0], sizes = [1, 128], strides = [1, 1]} : vector<8x128xf32> to vector<1x128xf32>
    %3 = vector.extract_strided_slice %0 {offsets = [2, 0], sizes = [1, 128], strides = [1, 1]} : vector<8x128xf32> to vector<1x128xf32>
    %c0_1 = arith.constant 0 : index
    %c0_2 = arith.constant 0 : index
    %4 = vector.load %arg1[%c0_1, %c0_2] : memref<8x12xf32, #tpu.memory_space<vmem>>, vector<8x12xf32>
    %c0_3 = arith.constant 0 : index
    %c0_4 = arith.constant 0 : index
    %5 = vector.load %arg3[%c0_3, %c0_4] : memref<12x128xf32, #tpu.memory_space<vmem>>, vector<12x128xf32>
    %cst = arith.constant dense<0.000000e+00> : vector<8x128xf32>
    %6 = tpu.matmul %4, %5, %cst {dimension_numbers = #tpu.dot_dimension_numbers<[1], [0], [0], [1], [0, 0, 1, 1], [], []>} : vector<8x12xf32>, vector<12x128xf32>, vector<8x128xf32> -> vector<8x128xf32>
    %c0_5 = arith.constant 0 : index
    %c0_6 = arith.constant 0 : index
    %7 = vector.load %arg2[%c0_5, %c0_6] : memref<8x4xf32, #tpu.memory_space<vmem>>, vector<8x4xf32>
    %c0_7 = arith.constant 0 : index
    %c0_8 = arith.constant 0 : index
    %8 = vector.load %arg4[%c0_7, %c0_8] : memref<4x128xf32, #tpu.memory_space<vmem>>, vector<4x128xf32>
    %cst_9 = arith.constant dense<0.000000e+00> : vector<8x128xf32>
    %9 = tpu.matmul %7, %8, %cst_9 {dimension_numbers = #tpu.dot_dimension_numbers<[1], [0], [0], [1], [0, 0, 1, 1], [], []>} : vector<8x4xf32>, vector<4x128xf32>, vector<8x128xf32> -> vector<8x128xf32>
    %10 = arith.addf %6, %9 : vector<8x128xf32>
    %11 = vector.broadcast %1 : vector<1x128xf32> to vector<8x128xf32>
    %12 = arith.addf %10, %11 : vector<8x128xf32>
    %cst_10 = arith.constant 0.000000e+00 : f32
    %13 = vector.broadcast %cst_10 : f32 to vector<8x128xf32>
    %14 = arith.maximumf %12, %13 : vector<8x128xf32>
    %c0_11 = arith.constant 0 : index
    %c0_12 = arith.constant 0 : index
    %15 = vector.load %arg5[%c0_11, %c0_12] : memref<128x128xf32, #tpu.memory_space<vmem>>, vector<128x128xf32>
    %cst_13 = arith.constant dense<0.000000e+00> : vector<8x128xf32>
    %16 = tpu.matmul %14, %15, %cst_13 {dimension_numbers = #tpu.dot_dimension_numbers<[1], [0], [0], [1], [0, 0, 1, 1], [], []>} : vector<8x128xf32>, vector<128x128xf32>, vector<8x128xf32> -> vector<8x128xf32>
    %17 = vector.broadcast %2 : vector<1x128xf32> to vector<8x128xf32>
    %18 = arith.addf %16, %17 : vector<8x128xf32>
    %cst_14 = arith.constant 0.000000e+00 : f32
    %19 = vector.broadcast %cst_14 : f32 to vector<8x128xf32>
    %20 = arith.maximumf %18, %19 : vector<8x128xf32>
    %21 = vector.broadcast %3 : vector<1x128xf32> to vector<8x128xf32>
    %22 = arith.mulf %20, %21 : vector<8x128xf32>
    %cst_15 = arith.constant dense<0.000000e+00> : vector<8xf32>
    %23 = vector.multi_reduction <add>, %22, %cst_15 [1] : vector<8x128xf32> to vector<8xf32>
    %c0_16 = arith.constant 0 : index
    %24 = memref.load %arg7[%c0_16] : memref<1xf32, #tpu.memory_space<smem>>
    %25 = vector.broadcast %24 : f32 to vector<8xf32>
    %26 = arith.addf %23, %25 : vector<8xf32>
    %27 = vector.shape_cast %26 : vector<8xf32> to vector<1x8xf32>
    %c0_17 = arith.constant 0 : index
    %c0_18 = arith.constant 0 : index
    %28 = vector.load %arg8[%c0_17, %c0_18] : memref<1x8xf32, #tpu.memory_space<vmem>>, vector<1x8xf32>
    tpu.vector_store %arg8[%c0_17, %c0_18], %27 {strides = array<i32>} : memref<1x8xf32, #tpu.memory_space<vmem>>, vector<1x8xf32>,
    return
  }
  func.func @transform_0(%arg0: i32) -> (i32, i32) {
    %c0_i32 = arith.constant 0 : i32
    %c0_i32_0 = arith.constant 0 : i32
    return %arg0, %c0_i32 : i32, i32
  }
  func.func @transform_1(%arg0: i32) -> (i32, i32) {
    %c0_i32 = arith.constant 0 : i32
    %c0_i32_0 = arith.constant 0 : i32
    return %arg0, %c0_i32 : i32, i32
  }
  func.func @transform_2(%arg0: i32) -> (i32, i32) {
    %c0_i32 = arith.constant 0 : i32
    %c0_i32_0 = arith.constant 0 : i32
    %c0_i32_1 = arith.constant 0 : i32
    return %c0_i32, %c0_i32_0 : i32, i32
  }
  func.func @transform_3(%arg0: i32) -> (i32, i32) {
    %c0_i32 = arith.constant 0 : i32
    %c0_i32_0 = arith.constant 0 : i32
    %c0_i32_1 = arith.constant 0 : i32
    return %c0_i32, %c0_i32_0 : i32, i32
  }
  func.func @transform_4(%arg0: i32) -> (i32, i32) {
    %c0_i32 = arith.constant 0 : i32
    %c0_i32_0 = arith.constant 0 : i32
    %c0_i32_1 = arith.constant 0 : i32
    return %c0_i32, %c0_i32_0 : i32, i32
  }
  func.func @transform_5(%arg0: i32) -> (i32, i32) {
    %c0_i32 = arith.constant 0 : i32
    %c0_i32_0 = arith.constant 0 : i32
    %c0_i32_1 = arith.constant 0 : i32
    return %c0_i32, %c0_i32_0 : i32, i32
  }
  func.func @transform_6(%arg0: i32) -> i32 {
    %c0_i32 = arith.constant 0 : i32
    %c0_i32_0 = arith.constant 0 : i32
    return %c0_i32 : i32
  }
  func.func @transform_7(%arg0: i32) -> (i32, i32) {
    %c0_i32 = arith.constant 0 : i32
    %c0_i32_0 = arith.constant 0 : i32
    return %c0_i32, %arg0 : i32, i32
  }
}

</mosaic_0001>

<llo_original>
// kernel: tpu_custom_call.1
$region0: #{tpu_custom_call.1}
  #allocation0 [shape = 'u32[]', space=smem, size = 0x4, offset = 0x4, fixed_abs, tag = 'smem constant byte address 0x4 - core index']
  #allocation1 [shape = 'u32[144,128]{1,0:T(1,128)}', space=vmem, size = 0x12000, scoped, tag = 'internal scratch']
  #allocation2 [shape = 'f32[1]{0:T(128)S(6)}', space=smem, size = 0x200, scoped, tag = 'scoped memory for tpu_custom_call.1']
  %s0 = inlined_call_operand.hbm [shape: f32[8,12], index: 0, kind: input, shape index: {}]
  %s1 = inlined_call_operand.vmem [shape: f32[8,4], index: 1, kind: input, shape index: {}]
  %s2 = inlined_call_operand.vmem [shape: f32[12,128], index: 2, kind: input, shape index: {}]
  %s3 = inlined_call_operand.hbm [shape: f32[4,128], index: 3, kind: input, shape index: {}]
  %s4 = inlined_call_operand.hbm [shape: f32[128,128], index: 4, kind: input, shape index: {}]
  %s5 = inlined_call_operand.vmem [shape: f32[8,128], index: 5, kind: input, shape index: {}]
  %s6 = inlined_call_operand.<no memory space> [shape: f32[1], index: 6, kind: input, shape index: {}]
  %s7 = inlined_call_operand.hbm [shape: f32[1,8], index: 7, kind: output, shape index: {}]
  %s8 = sld [smem:[#allocation0]]
  $region50: #{tpu_custom_call.1} parent=0
    _
  %s10 = ssub.s32 1, %s8
  %s11 = scalar_select 0, %s10, %s8
  %12 = sst [smem:[#allocation2]] %s6
  $region1: #{tpu_custom_call.1} parent=0
    #allocation3 [shape = 'u8[4096]{0}', space=vmem, size = 0x1000, scoped, tag = 'input window, operand 0, single buffered']
    #allocation4 [shape = 's32[1]{0}', space=sflag, size = 0x4, scoped, tag = 'scoped memory for tpu_custom_call.1']
    #allocation5 [shape = 's32[1]{0}', space=sflag, size = 0x4, scoped, tag = 'scoped memory for tpu_custom_call.1']
    #allocation6 [shape = 'u8[2048]{0}', space=vmem, size = 0x800, scoped, tag = 'input window, operand 3, single buffered']
    #allocation7 [shape = 's32[1]{0}', space=sflag, size = 0x4, scoped, tag = 'scoped memory for tpu_custom_call.1']
    #allocation8 [shape = 'u8[65536]{0}', space=vmem, size = 0x10000, scoped, tag = 'input window, operand 4, single buffered']
    #allocation9 [shape = 'u8[512]{0}', space=vmem, size = 0x400, scoped, tag = 'output window, operand 0, single buffered']
    %13 = vsyncpa [#allocation4], 0
    %14 = vsyncpa [#allocation7], 0
    %15 = vsyncpa [#allocation5], 0
    // Predicated region
    $region2: #{tpu_custom_call.1} parent=1 // pred_check
      _
    $region3: #{tpu_custom_call.1} parent=1 // pred_check_branch
      %17 = sbr.rel (0) target = $region5
    $region4: #{tpu_custom_call.1} parent=1 // pred_region
      %s19 = ssub.s32 128, 128
      %20 = vsyncadd [#allocation4], %s19
      %s22 = sshll.u32 [#allocation3], 4
      %s23 = int_to_ptr.vmem [resolvable:$true] %s22
      %25 = dma.hbm_to_vmem [thread:$0]  %s0, 128, %s23, [#allocation4]
    $region5: #{tpu_custom_call.1} parent=1 // pred_fallthru
      _
    // Predicated region
    $region6: #{tpu_custom_call.1} parent=1 // pred_check
      _
    $region7: #{tpu_custom_call.1} parent=1 // pred_check_branch
      %27 = sbr.rel (0) target = $region9
    $region8: #{tpu_custom_call.1} parent=1 // pred_region
      _
    $region9: #{tpu_custom_call.1} parent=1 // pred_fallthru
      _
    // Predicated region
    $region10: #{tpu_custom_call.1} parent=1 // pred_check
      _
    $region11: #{tpu_custom_call.1} parent=1 // pred_check_branch
      %29 = sbr.rel (0) target = $region13
    $region12: #{tpu_custom_call.1} parent=1 // pred_region
      _
    $region13: #{tpu_custom_call.1} parent=1 // pred_fallthru
      _
    // Predicated region
    $region14: #{tpu_custom_call.1} parent=1 // pred_check
      _
    $region15: #{tpu_custom_call.1} parent=1 // pred_check_branch
      %31 = sbr.rel (0) target = $region17
    $region16: #{tpu_custom_call.1} parent=1 // pred_region
      %s33 = ssub.s32 64, 64
      %34 = vsyncadd [#allocation7], %s33
      %s36 = sshll.u32 [#allocation6], 4
      %s37 = int_to_ptr.vmem [resolvable:$true] %s36
      %39 = dma.hbm_to_vmem [thread:$0]  %s3, 64, %s37, [#allocation7]
    $region17: #{tpu_custom_call.1} parent=1 // pred_fallthru
      _
    // Predicated region
    $region18: #{tpu_custom_call.1} parent=1 // pred_check
      _
    $region19: #{tpu_custom_call.1} parent=1 // pred_check_branch
      %41 = sbr.rel (0) target = $region21
    $region20: #{tpu_custom_call.1} parent=1 // pred_region
      %s43 = ssub.s32 2048, 2048
      %44 = vsyncadd [#allocation7], %s43
      %s45 = sshll.u32 [#allocation8], 4
      %s46 = int_to_ptr.vmem [resolvable:$true] %s45
      %51 = dma.hbm_to_vmem [thread:$0]  %s4, 2048, %s46, [#allocation7], 128, 128, 8
    $region21: #{tpu_custom_call.1} parent=1 // pred_fallthru
      _
    // Predicated region
    $region22: #{tpu_custom_call.1} parent=1 // pred_check
      _
    $region23: #{tpu_custom_call.1} parent=1 // pred_check_branch
      %53 = sbr.rel (0) target = $region25
    $region24: #{tpu_custom_call.1} parent=1 // pred_region
      _
    $region25: #{tpu_custom_call.1} parent=1 // pred_fallthru
      _
    // Predicated region
    $region26: #{tpu_custom_call.1} parent=1 // pred_check
      _
    $region27: #{tpu_custom_call.1} parent=1 // pred_check_branch
      %55 = sbr.rel (0) target = $region29
    $region28: #{tpu_custom_call.1} parent=1 // pred_region
      _
    $region29: #{tpu_custom_call.1} parent=1 // pred_fallthru
      _
    // Predicated region
    $region30: #{tpu_custom_call.1} parent=1 // pred_check
      _
    $region31: #{tpu_custom_call.1} parent=1 // pred_check_branch
      %57 = sbr.rel (0) target = $region33
    $region32: #{tpu_custom_call.1} parent=1 // pred_region
      %58 = dma.done [#allocation4], 128
    $region33: #{tpu_custom_call.1} parent=1 // pred_fallthru
      _
    // Predicated region
    $region34: #{tpu_custom_call.1} parent=1 // pred_check
      _
    $region35: #{tpu_custom_call.1} parent=1 // pred_check_branch
      %60 = sbr.rel (0) target = $region37
    $region36: #{tpu_custom_call.1} parent=1 // pred_region
      %61 = dma.done [#allocation7], 64
    $region37: #{tpu_custom_call.1} parent=1 // pred_fallthru
      _
    // Predicated region
    $region38: #{tpu_custom_call.1} parent=1 // pred_check
      _
    $region39: #{tpu_custom_call.1} parent=1 // pred_check_branch
      %63 = sbr.rel (0) target = $region41
    $region40: #{tpu_custom_call.1} parent=1 // pred_region
      %64 = dma.done [#allocation7], 2048
    $region41: #{tpu_custom_call.1} parent=1 // pred_fallthru
      _
    %v65 = vld [vmem:[%s5] sm:$0xff]
    %v66 = vld [vmem:[#allocation3] sm:$0xff]
    %v67 = vld [vmem:[%s2] sm:$0xff]
    %v68 = vld [vmem:[%s2 + $0x8] sm:$0xf]
    %v69 = vld [vmem:[%s1] sm:$0xff]
    %v70 = vld [vmem:[#allocation6] sm:$0xf]
    %vm71 = vcmask 31744
    %v73 = vsel %vm71, %v69, 0
    %vm75 = vcmask 1043456
    %v77 = vsel %vm75, %v70, 0
    %79 = vmatprep.subr.mxu0 0.0
    %80 = vmatpush1.msra.mxu0 %v77
    %81 = vmatprep.subr.mxu0 0.0
    %82 = vmatpush1.msra.mxu0 0.0
    %83 = vmatprep.subr.mxu0 0.0
    %84 = vmatpush1.msra.mxu0 0.0
    %85 = vmatprep.subr.mxu0 0.0
    %86 = vmatpush1.msra.mxu0 0.0
    %87 = vmatprep.subr.mxu0 0.0
    %88 = vmatpush1.msra.mxu0 0.0
    %89 = vmatprep.subr.mxu0 0.0
    %90 = vmatpush1.msra.mxu0 0.0
    %91 = vmatprep.subr.mxu0 0.0
    %92 = vmatpush1.msra.mxu0 0.0
    %93 = vmatprep.subr.mxu0 0.0
    %94 = vmatpush1.msra.mxu0 0.0
    %95 = vmatprep.subr.mxu0 0.0
    %96 = vmatpush1.msra.mxu0 0.0
    %97 = vmatprep.subr.mxu0 0.0
    %98 = vmatpush1.msra.mxu0 0.0
    %99 = vmatprep.subr.mxu0 0.0
    %100 = vmatpush1.msra.mxu0 0.0
    %101 = vmatprep.subr.mxu0 0.0
    %102 = vmatpush1.msra.mxu0 0.0
    %103 = vmatprep.subr.mxu0 0.0
    %104 = vmatpush1.msra.mxu0 0.0
    %105 = vmatprep.subr.mxu0 0.0
    %106 = vmatpush1.msra.mxu0 0.0
    %107 = vmatprep.subr.mxu0 0.0
    %108 = vmatpush1.msra.mxu0 0.0
    %109 = vmatprep.subr.mxu0 0.0
    %110 = vmatpush1.msra.mxu0 0.0
    %111 = vmatprep.subr.mxu0 0.0
    %112 = vmatpush1.msra.mxu0 0.0
    %113 = vmatprep.subr.mxu0 0.0
    %114 = vmatpush1.msra.mxu0 0.0
    %115 = vmatprep.subr.mxu0 0.0
    %116 = vmatpush1.msra.mxu0 0.0
    %117 = vmatprep.subr.mxu0 0.0
    %118 = vmatpush1.msra.mxu0 0.0
    %119 = vmatprep.subr.mxu0 0.0
    %120 = vmatpush1.msra.mxu0 0.0
    %121 = vmatprep.subr.mxu0 0.0
    %122 = vmatpush1.msra.mxu0 0.0
    %123 = vmatprep.subr.mxu0 0.0
    %124 = vmatpush1.msra.mxu0 0.0
    %125 = vmatprep.subr.mxu0 0.0
    %126 = vmatpush1.msra.mxu0 0.0
    %127 = vmatprep.subr.mxu0 0.0
    %128 = vmatpush1.msra.mxu0 0.0
    %129 = vmatprep.subr.mxu0 0.0
    %130 = vmatpush1.msra.mxu0 0.0
    %131 = vmatprep.subr.mxu0 0.0
    %132 = vmatpush1.msra.mxu0 0.0
    %133 = vmatprep.subr.mxu0 0.0
    %134 = vmatpush1.msra.mxu0 0.0
    %135 = vmatprep.subr.mxu0 0.0
    %136 = vmatpush1.msra.mxu0 0.0
    %137 = vmatprep.subr.mxu0 0.0
    %138 = vmatpush1.msra.mxu0 0.0
    %139 = vmatprep.subr.mxu0 0.0
    %140 = vmatpush1.msra.mxu0 0.0
    %141 = vmatprep.subr.mxu0 0.0
    %142 = vmatpush1.msra.mxu0 0.0
    %143 = vmatprep.mubr.f32.mxu0 0.0
    %144 = vmatmul.mubr.f32.gmra.mrb[0].mxu0 %v73
    %v145 = vpop.f32.mrb[0].mxu0
    %v146 = vadd.f32 0.0, %v145
    %v147 = vpop.f32.mrb[0].mxu0
    %148 = vdwg.mxu0
    %vm149 = vcmask 97280
    %v151 = vsel %vm149, %v66, 0
    %v154 = vsel %vm75, %v68, 0
    %156 = vmatprep.subr.mxu0 0.0
    %157 = vmatpush1.msra.mxu0 %v67
    %158 = vmatprep.subr.mxu0 0.0
    %159 = vmatpush1.msra.mxu0 %v154
    %160 = vmatprep.subr.mxu0 0.0
    %161 = vmatpush1.msra.mxu0 0.0
    %162 = vmatprep.subr.mxu0 0.0
    %163 = vmatpush1.msra.mxu0 0.0
    %164 = vmatprep.subr.mxu0 0.0
    %165 = vmatpush1.msra.mxu0 0.0
    %166 = vmatprep.subr.mxu0 0.0
    %167 = vmatpush1.msra.mxu0 0.0
    %168 = vmatprep.subr.mxu0 0.0
    %169 = vmatpush1.msra.mxu0 0.0
    %170 = vmatprep.subr.mxu0 0.0
    %171 = vmatpush1.msra.mxu0 0.0
    %172 = vmatprep.subr.mxu0 0.0
    %173 = vmatpush1.msra.mxu0 0.0
    %174 = vmatprep.subr.mxu0 0.0
    %175 = vmatpush1.msra.mxu0 0.0
    %176 = vmatprep.subr.mxu0 0.0
    %177 = vmatpush1.msra.mxu0 0.0
    %178 = vmatprep.subr.mxu0 0.0
    %179 = vmatpush1.msra.mxu0 0.0
    %180 = vmatprep.subr.mxu0 0.0
    %181 = vmatpush1.msra.mxu0 0.0
    %182 = vmatprep.subr.mxu0 0.0
    %183 = vmatpush1.msra.mxu0 0.0
    %184 = vmatprep.subr.mxu0 0.0
    %185 = vmatpush1.msra.mxu0 0.0
    %186 = vmatprep.subr.mxu0 0.0
    %187 = vmatpush1.msra.mxu0 0.0
    %188 = vmatprep.subr.mxu0 0.0
    %189 = vmatpush1.msra.mxu0 0.0
    %190 = vmatprep.subr.mxu0 0.0
    %191 = vmatpush1.msra.mxu0 0.0
    %192 = vmatprep.subr.mxu0 0.0
    %193 = vmatpush1.msra.mxu0 0.0
    %194 = vmatprep.subr.mxu0 0.0
    %195 = vmatpush1.msra.mxu0 0.0
    %196 = vmatprep.subr.mxu0 0.0
    %197 = vmatpush1.msra.mxu0 0.0
    %198 = vmatprep.subr.mxu0 0.0
    %199 = vmatpush1.msra.mxu0 0.0
    %200 = vmatprep.subr.mxu0 0.0
    %201 = vmatpush1.msra.mxu0 0.0
    %202 = vmatprep.subr.mxu0 0.0
    %203 = vmatpush1.msra.mxu0 0.0
    %204 = vmatprep.subr.mxu0 0.0
    %205 = vmatpush1.msra.mxu0 0.0
    %206 = vmatprep.subr.mxu0 0.0
    %207 = vmatpush1.msra.mxu0 0.0
    %208 = vmatprep.subr.mxu0 0.0
    %209 = vmatpush1.msra.mxu0 0.0
    %210 = vmatprep.subr.mxu0 0.0
    %211 = vmatpush1.msra.mxu0 0.0
    %212 = vmatprep.subr.mxu0 0.0
    %213 = vmatpush1.msra.mxu0 0.0
    %214 = vmatprep.subr.mxu0 0.0
    %215 = vmatpush1.msra.mxu0 0.0
    %216 = vmatprep.subr.mxu0 0.0
    %217 = vmatpush1.msra.mxu0 0.0
    %218 = vmatprep.subr.mxu0 0.0
    %219 = vmatpush1.msra.mxu0 0.0
    %220 = vmatprep.mubr.f32.mxu0 0.0
    %221 = vmatmul.mubr.f32.gmra.mrb[0].mxu0 %v151
    %v222 = vpop.f32.mrb[0].mxu0
    %v223 = vadd.f32 %v146, %v222
    %v224 = vpop.f32.mrb[0].mxu0
    %225 = vdwg.mxu0
    %v226 = vlaneseq
    %v227 = vshrl.u32 %v226, 7
    %v228 = vsub.s32 0, %v227
    %v229 = vrot.slane %v65, %v228
    %v230 = vadd.f32 %v223, %v229
    %v231 = vmax.f32 %v230, 0.0
    %v232 = vld [vmem:[#allocation8] sm:$0xff]
    %v233 = vld [vmem:[#allocation8 + $0x8] sm:$0xff]
    %v234 = vld [vmem:[#allocation8 + $0x10] sm:$0xff]
    %v235 = vld [vmem:[#allocation8 + $0x18] sm:$0xff]
    %v236 = vld [vmem:[#allocation8 + $0x20] sm:$0xff]
    %v237 = vld [vmem:[#allocation8 + $0x28] sm:$0xff]
    %v238 = vld [vmem:[#allocation8 + $0x30] sm:$0xff]
    %v239 = vld [vmem:[#allocation8 + $0x38] sm:$0xff]
    %v240 = vld [vmem:[#allocation8 + $0x40] sm:$0xff]
    %v241 = vld [vmem:[#allocation8 + $0x48] sm:$0xff]
    %v242 = vld [vmem:[#allocation8 + $0x50] sm:$0xff]
    %v243 = vld [vmem:[#allocation8 + $0x58] sm:$0xff]
    %v244 = vld [vmem:[#allocation8 + $0x60] sm:$0xff]
    %v245 = vld [vmem:[#allocation8 + $0x68] sm:$0xff]
    %v246 = vld [vmem:[#allocation8 + $0x70] sm:$0xff]
    %v247 = vld [vmem:[#allocation8 + $0x78] sm:$0xff]
    %v248 = vlaneseq
    %v249 = vshrl.u32 %v248, 7
    %v250 = vsub.s32 1, %v249
    %v251 = vrot.slane %v65, %v250
    %252 = vmatprep.subr.mxu0 0.0
    %253 = vmatpush1.msra.mxu0 %v232
    %254 = vmatprep.subr.mxu0 0.0
    %255 = vmatpush1.msra.mxu0 %v233
    %256 = vmatprep.subr.mxu0 0.0
    %257 = vmatpush1.msra.mxu0 %v234
    %258 = vmatprep.subr.mxu0 0.0
    %259 = vmatpush1.msra.mxu0 %v235
    %260 = vmatprep.subr.mxu0 0.0
    %261 = vmatpush1.msra.mxu0 %v236
    %262 = vmatprep.subr.mxu0 0.0
    %263 = vmatpush1.msra.mxu0 %v237
    %264 = vmatprep.subr.mxu0 0.0
    %265 = vmatpush1.msra.mxu0 %v238
    %266 = vmatprep.subr.mxu0 0.0
    %267 = vmatpush1.msra.mxu0 %v239
    %268 = vmatprep.subr.mxu0 0.0
    %269 = vmatpush1.msra.mxu0 %v240
    %270 = vmatprep.subr.mxu0 0.0
    %271 = vmatpush1.msra.mxu0 %v241
    %272 = vmatprep.subr.mxu0 0.0
    %273 = vmatpush1.msra.mxu0 %v242
    %274 = vmatprep.subr.mxu0 0.0
    %275 = vmatpush1.msra.mxu0 %v243
    %276 = vmatprep.subr.mxu0 0.0
    %277 = vmatpush1.msra.mxu0 %v244
    %278 = vmatprep.subr.mxu0 0.0
    %279 = vmatpush1.msra.mxu0 %v245
    %280 = vmatprep.subr.mxu0 0.0
    %281 = vmatpush1.msra.mxu0 %v246
    %282 = vmatprep.subr.mxu0 0.0
    %283 = vmatpush1.msra.mxu0 %v247
    %284 = vmatprep.subr.mxu0 0.0
    %285 = vmatpush1.msra.mxu0 0.0
    %286 = vmatprep.subr.mxu0 0.0
    %287 = vmatpush1.msra.mxu0 0.0
    %288 = vmatprep.subr.mxu0 0.0
    %289 = vmatpush1.msra.mxu0 0.0
    %290 = vmatprep.subr.mxu0 0.0
    %291 = vmatpush1.msra.mxu0 0.0
    %292 = vmatprep.subr.mxu0 0.0
    %293 = vmatpush1.msra.mxu0 0.0
    %294 = vmatprep.subr.mxu0 0.0
    %295 = vmatpush1.msra.mxu0 0.0
    %296 = vmatprep.subr.mxu0 0.0
    %297 = vmatpush1.msra.mxu0 0.0
    %298 = vmatprep.subr.mxu0 0.0
    %299 = vmatpush1.msra.mxu0 0.0
    %300 = vmatprep.subr.mxu0 0.0
    %301 = vmatpush1.msra.mxu0 0.0
    %302 = vmatprep.subr.mxu0 0.0
    %303 = vmatpush1.msra.mxu0 0.0
    %304 = vmatprep.subr.mxu0 0.0
    %305 = vmatpush1.msra.mxu0 0.0
    %306 = vmatprep.subr.mxu0 0.0
    %307 = vmatpush1.msra.mxu0 0.0
    %308 = vmatprep.subr.mxu0 0.0
    %309 = vmatpush1.msra.mxu0 0.0
    %310 = vmatprep.subr.mxu0 0.0
    %311 = vmatpush1.msra.mxu0 0.0
    %312 = vmatprep.subr.mxu0 0.0
    %313 = vmatpush1.msra.mxu0 0.0
    %314 = vmatprep.subr.mxu0 0.0
    %315 = vmatpush1.msra.mxu0 0.0
    %316 = vmatprep.mubr.f32.mxu0 0.0
    %317 = vmatmul.mubr.f32.gmra.mrb[0].mxu0 %v231
    %v318 = vpop.f32.mrb[0].mxu0
    %v319 = vadd.f32 %v251, %v318
    %v320 = vpop.f32.mrb[0].mxu0
    %321 = vdwg.mxu0
    %v322 = vmax.f32 %v319, 0.0
    %v323 = vlaneseq
    %v324 = vshrl.u32 %v323, 7
    %v325 = vsub.s32 2, %v324
    %v326 = vrot.slane %v65, %v325
    %v327 = vmul.f32 %v322, %v326
    %328 = vadd.xlane.f32.xlu0 %v327
    %v329 = vpop.xlane.xlu0 %328
    %s330 = sld [smem:[#allocation2]]
    %v331 = vstv %s330
    %v332 = vadd.f32 %v329, %v331
    %v334 = vlaneseq
    %v335 = vand.u32 %v334, 127
    %v336 = vlaneseq
    %v337 = vshrl.u32 %v336, 7
    %v338 = vsub.s32 %v335, %v337
    %v339 = vrot.slane %v332, %v338
    %vm341 = vcmask 57344
    %342 = vst.msk [vmem:[#allocation9] sm:$0x1] %vm341, %v339
    // Predicated region
    $region42: #{tpu_custom_call.1} parent=1 // pred_check
      _
    $region43: #{tpu_custom_call.1} parent=1 // pred_check_branch
      %344 = sbr.rel (0) target = $region45
    $region44: #{tpu_custom_call.1} parent=1 // pred_region
      %s346 = ssub.s32 16, 16
      %347 = vsyncadd [#allocation5], %s346
      %s349 = sshll.u32 [#allocation9], 4
      %s350 = int_to_ptr.vmem [resolvable:$true] %s349
      %352 = dma.vmem_to_hbm [thread:$0]  %s350, 16, %s7, [#allocation5]
    $region45: #{tpu_custom_call.1} parent=1 // pred_fallthru
      _
    // Predicated region
    $region46: #{tpu_custom_call.1} parent=1 // pred_check
      _
    $region47: #{tpu_custom_call.1} parent=1 // pred_check_branch
      %354 = sbr.rel (0) target = $region49
    $region48: #{tpu_custom_call.1} parent=1 // pred_region
      %355 = dma.done [#allocation5], 16
    $region49: #{tpu_custom_call.1} parent=1 // pred_fallthru
      _
    %356 = vsyncpa [#allocation4], 1
    %357 = vsyncpa [#allocation7], 1
    %358 = vsyncpa [#allocation5], 1

</llo_original>
